<compile_context>
chip_gen: v5e
topology: v5e:2x2
jax: 0.10.0
libtpu: 0.0.40
codegen_flags: <defaults>
</compile_context>

<pallas_src>
import functools

import jax
import jax.numpy as jnp
from jax.experimental import pallas as pl
from jax.experimental.pallas import tpu as pltpu


def _round_up(a: int, b: int) -> int:
    return ((a + b - 1) // b) * b


def _pick_lane_tile(C: int, HW: int, itemsize: int,
                    vmem_budget: int = 12 * 1024 * 1024) -> int:
    """Largest lane tile (multiple of 128, <= 8192) whose double-buffered
    working set (x, y, preds blocks + f32 temporaries) fits the budget."""
    bytes_per_lane = 8 * C * max(itemsize, 4)   # ~8 live (C, T) slabs of f32
    max_t = max(128, vmem_budget // bytes_per_lane)
    t = min(8192, max_t, _round_up(HW, 128))
    return max(128, (t // 128) * 128)


def _softmax3d_kernel(x_ref, y_ref, preds_ref, loss_ref, *, hw, lane_tile):
    # x_ref / y_ref : (1, C, T) blocks for the current (batch, lane-tile).
    x = x_ref[0].astype(jnp.float32)                 # (C, T)
    y = y_ref[0].astype(jnp.float32)                 # (C, T)

    # Channel-wise max / shifted logits (sublane reductions -> XLU, cheap).
    m = jnp.max(x, axis=0, keepdims=True)            # (1, T)
    e = x - m                                        # (C, T)   == exp_loss
    s = jnp.sum(jnp.exp(e), axis=0, keepdims=True)   # (1, T)   == sum_exp_loss

    # preds = exp_loss / sum_exp_loss  (exact reciprocal-multiply).
    inv_s = pl.reciprocal(s, approx=False)           # (1, T)
    preds_ref[0] = (e * inv_s).astype(preds_ref.dtype)

    # Per-pixel loss term: -sum(y*e, dim=C) + log(sum_exp).
    row = jnp.log(s) - jnp.sum(y * e, axis=0, keepdims=True)   # (1, T)

    # Mask padded lanes of the last tile — emitted only if padding exists.
    if hw % lane_tile != 0:
        lane_ids = jax.lax.broadcasted_iota(jnp.int32, row.shape, 1)
        global_ids = pl.program_id(1) * lane_tile + lane_ids
        row = jnp.where(global_ids < hw, row, 0.0)

    # One scalar per (batch, tile) grid cell, stored in lane 0 of a (1, 128)
    # slab (zeros elsewhere) so the wrapper-side sum recovers it exactly.
    partial = jnp.sum(row)
    lane = jax.lax.broadcasted_iota(jnp.int32, (1, 128), 1)
    loss_ref[0, 0] = jnp.where(lane == 0, partial, 0.0)


def softmax3d_forward(x, y, *, lane_tile=None):
    """x, y: (B, C, H, W) arrays.  Returns (loss_scalar, preds (B, C, H, W))."""
    B, C, H, W = x.shape
    HW = H * W

    T = lane_tile if lane_tile is not None else _pick_lane_tile(
        C, HW, jnp.dtype(x.dtype).itemsize)
    T = _round_up(min(T, _round_up(HW, 128)), 128)
    n_tiles = pl.cdiv(HW, T)
    HW_pad = n_tiles * T

    x3 = x.reshape(B, C, HW)
    y3 = y.reshape(B, C, HW)
    if HW_pad != HW:
        pad = ((0, 0), (0, 0), (0, HW_pad - HW))
        x3 = jnp.pad(x3, pad)
        y3 = jnp.pad(y3, pad)

    kernel = functools.partial(_softmax3d_kernel, hw=HW, lane_tile=T)

    preds3, loss_partials = pl.pallas_call(
        kernel,
        out_shape=(
            jax.ShapeDtypeStruct((B, C, HW_pad), x.dtype),
            jax.ShapeDtypeStruct((B, n_tiles, 1, 128), jnp.float32),
        ),
        grid_spec=pltpu.PrefetchScalarGridSpec(
            num_scalar_prefetch=0,
            grid=(B, n_tiles),
            in_specs=[
                pl.BlockSpec((1, C, T), lambda b, t: (b, 0, t)),
                pl.BlockSpec((1, C, T), lambda b, t: (b, 0, t)),
            ],
            out_specs=[
                pl.BlockSpec((1, C, T), lambda b, t: (b, 0, t)),
                pl.BlockSpec((1, 1, 1, 128), lambda b, t: (b, t, 0, 0)),
            ],
        ),
        compiler_params=pltpu.CompilerParams(
            dimension_semantics=("parallel", "parallel"),
            vmem_limit_bytes=32 * 1024 * 1024,
        ),
    )(x3, y3)

    # mean over the (B, 1, H, W) per-pixel loss map == sum / (B*HW).
    loss = jnp.sum(loss_partials) / jnp.float32(B * HW)
    preds = preds3[:, :, :HW].reshape(B, C, H, W)
    return loss, preds


def _reference(x, y):
    """Pure-JAX reference mirroring the PyTorch code."""
    e = x - jnp.max(x, axis=1, keepdims=True)
    s = jnp.sum(jnp.exp(e), axis=1, keepdims=True)
    loss = jnp.mean(-jnp.sum(y * e, axis=1, keepdims=True) + jnp.log(s))
    preds = e / s
    return loss, preds


if __name__ == "__main__":
    key = jax.random.PRNGKey(0)
    kx, ky = jax.random.split(key)

    B, C, H, W = 2, 4, 16, 16
    x = jax.random.normal(kx, (B, C, H, W), dtype=jnp.float32)
    # y: one-hot targets over the channel axis (any values broadcast fine)
    labels = jax.random.randint(ky, (B, H, W), 0, C)
    y = jax.nn.one_hot(labels, C, axis=1).astype(jnp.float32)  # (B, C, H, W)

    loss, preds = jax.jit(softmax3d_forward)(x, y)
    loss = jax.block_until_ready(loss)
    preds = jax.block_until_ready(preds)

    ref_loss, ref_preds = _reference(x, y)
    assert jnp.allclose(loss, ref_loss, atol=1e-5, rtol=1e-5)
    assert jnp.allclose(preds, ref_preds, atol=1e-5, rtol=1e-5)

    print("KERNEL_OK")
</pallas_src>

<mosaic_0001>
module attributes {stable_mosaic.version = 11 : i64} {
  func.func @_softmax3d_kernel(%arg0: i32, %arg1: i32, %arg2: memref<1x4x256xf32, #tpu.memory_space<vmem>>, %arg3: memref<1x4x256xf32, #tpu.memory_space<vmem>>, %arg4: memref<1x4x256xf32, #tpu.memory_space<vmem>>, %arg5: memref<1x1x1x128xf32, #tpu.memory_space<vmem>>) attributes {dimension_semantics = [#tpu.dimension_semantics<parallel>, #tpu.dimension_semantics<parallel>], iteration_bounds = array<i64: 2, 1>, scalar_prefetch = 0 : i64, scratch_operands = 0 : i64, tpu.core_type = #tpu.core_type<tc>, window_params = [{transform_indices = @transform_0, window_bounds = array<i64: 1, 4, 256>}, {transform_indices = @transform_1, window_bounds = array<i64: 1, 4, 256>}, {transform_indices = @transform_2, window_bounds = array<i64: 1, 4, 256>}, {transform_indices = @transform_3, window_bounds = array<i64: 1, 1, 1, 128>}]} {
    %c0 = arith.constant 0 : index
    %c0_0 = arith.constant 0 : index
    %c0_1 = arith.constant 0 : index
    %0 = vector.load %arg2[%c0, %c0_0, %c0_1] : memref<1x4x256xf32, #tpu.memory_space<vmem>>, vector<1x4x256xf32>
    %1 = vector.shape_cast %0 : vector<1x4x256xf32> to vector<4x256xf32>
    %c0_2 = arith.constant 0 : index
    %c0_3 = arith.constant 0 : index
    %c0_4 = arith.constant 0 : index
    %2 = vector.load %arg3[%c0_2, %c0_3, %c0_4] : memref<1x4x256xf32, #tpu.memory_space<vmem>>, vector<1x4x256xf32>
    %3 = vector.shape_cast %2 : vector<1x4x256xf32> to vector<4x256xf32>
    %cst = arith.constant dense<0xFF800000> : vector<256xf32>
    %4 = vector.multi_reduction <maximumf>, %1, %cst [0] : vector<4x256xf32> to vector<256xf32>
    %5 = vector.shape_cast %4 : vector<256xf32> to vector<1x256xf32>
    %6 = vector.broadcast %5 : vector<1x256xf32> to vector<4x256xf32>
    %7 = arith.subf %1, %6 : vector<4x256xf32>
    %8 = math.exp %7 : vector<4x256xf32>
    %cst_5 = arith.constant dense<0.000000e+00> : vector<256xf32>
    %9 = vector.multi_reduction <add>, %8, %cst_5 [0] : vector<4x256xf32> to vector<256xf32>
    %10 = vector.shape_cast %9 : vector<256xf32> to vector<1x256xf32>
    %11 = tpu.reciprocal %10 : vector<1x256xf32> -> vector<1x256xf32>
    %12 = vector.broadcast %11 : vector<1x256xf32> to vector<4x256xf32>
    %13 = arith.mulf %7, %12 : vector<4x256xf32>
    %c0_6 = arith.constant 0 : index
    %c0_7 = arith.constant 0 : index
    %c0_8 = arith.constant 0 : index
    %14 = vector.load %arg4[%c0_6, %c0_7, %c0_8] : memref<1x4x256xf32, #tpu.memory_space<vmem>>, vector<1x4x256xf32>
    %15 = vector.shape_cast %14 : vector<1x4x256xf32> to vector<4x256xf32>
    %16 = vector.shape_cast %13 : vector<4x256xf32> to vector<1x4x256xf32>
    tpu.vector_store %arg4[%c0_6, %c0_7, %c0_8], %16 {strides = array<i32>} : memref<1x4x256xf32, #tpu.memory_space<vmem>>, vector<1x4x256xf32>,
    %17 = math.log %10 : vector<1x256xf32>
    %18 = arith.mulf %3, %7 : vector<4x256xf32>
    %cst_9 = arith.constant dense<0.000000e+00> : vector<256xf32>
    %19 = vector.multi_reduction <add>, %18, %cst_9 [0] : vector<4x256xf32> to vector<256xf32>
    %20 = vector.shape_cast %19 : vector<256xf32> to vector<1x256xf32>
    %21 = arith.subf %17, %20 : vector<1x256xf32>
    %22 = vector.shape_cast %21 : vector<1x256xf32> to vector<1x1x256xf32>
    %cst_10 = arith.constant dense<0.000000e+00> : vector<1xf32>
    %23 = vector.multi_reduction <add>, %22, %cst_10 [1, 2] : vector<1x1x256xf32> to vector<1xf32>
    %24 = vector.shape_cast %23 : vector<1xf32> to vector<1x1x1xf32>
    %25 = vector.extract %24[0, 0, 0] : f32 from vector<1x1x1xf32>
    %26 = tpu.iota {dimensions = array<i32: 1>} : vector<1x128xi32>
    %c0_i32 = arith.constant 0 : i32
    %27 = vector.broadcast %c0_i32 : i32 to vector<1x128xi32>
    %28 = arith.cmpi eq, %26, %27 : vector<1x128xi32>
    %cst_11 = arith.constant 0.000000e+00 : f32
    %29 = vector.broadcast %25 : f32 to vector<1x128xf32>
    %30 = vector.broadcast %cst_11 : f32 to vector<1x128xf32>
    %31 = arith.select %28, %29, %30 : vector<1x128xi1>, vector<1x128xf32>
    %c0_12 = arith.constant 0 : index
    %c0_13 = arith.constant 0 : index
    %c0_14 = arith.constant 0 : index
    %c0_15 = arith.constant 0 : index
    %32 = vector.load %arg5[%c0_12, %c0_13, %c0_14, %c0_15] : memref<1x1x1x128xf32, #tpu.memory_space<vmem>>, vector<1x1x1x128xf32>
    %33 = vector.shape_cast %32 : vector<1x1x1x128xf32> to vector<1x128xf32>
    %34 = vector.shape_cast %31 : vector<1x128xf32> to vector<1x1x1x128xf32>
    tpu.vector_store %arg5[%c0_12, %c0_13, %c0_14, %c0_15], %34 {strides = array<i32>} : memref<1x1x1x128xf32, #tpu.memory_space<vmem>>, vector<1x1x1x128xf32>,
    return
  }
  func.func @transform_0(%arg0: i32, %arg1: i32) -> (i32, i32, i32) {
    %c0_i32 = arith.constant 0 : i32
    %c0_i32_0 = arith.constant 0 : i32
    return %arg0, %c0_i32, %arg1 : i32, i32, i32
  }
  func.func @transform_1(%arg0: i32, %arg1: i32) -> (i32, i32, i32) {
    %c0_i32 = arith.constant 0 : i32
    %c0_i32_0 = arith.constant 0 : i32
    return %arg0, %c0_i32, %arg1 : i32, i32, i32
  }
  func.func @transform_2(%arg0: i32, %arg1: i32) -> (i32, i32, i32) {
    %c0_i32 = arith.constant 0 : i32
    %c0_i32_0 = arith.constant 0 : i32
    return %arg0, %c0_i32, %arg1 : i32, i32, i32
  }
  func.func @transform_3(%arg0: i32, %arg1: i32) -> (i32, i32, i32, i32) {
    %c0_i32 = arith.constant 0 : i32
    %c0_i32_0 = arith.constant 0 : i32
    %c0_i32_1 = arith.constant 0 : i32
    return %arg0, %arg1, %c0_i32, %c0_i32_0 : i32, i32, i32, i32
  }
}

</mosaic_0001>

<llo_original>
// kernel: softmax3d_forward.1
$region0: #{softmax3d_forward.1}
  #allocation0 [shape = 'u32[]', space=smem, size = 0x4, offset = 0x4, fixed_abs, tag = 'smem constant byte address 0x4 - core index']
  #allocation1 [shape = 'u32[72,128]{1,0:T(1,128)}', space=vmem, size = 0x9000, scoped, tag = 'internal scratch']
  %s0 = inlined_call_operand.vmem [shape: f32[2,4,256], index: 0, kind: input, shape index: {}]
  %s1 = inlined_call_operand.vmem [shape: f32[2,4,256], index: 1, kind: input, shape index: {}]
  %s2 = inlined_call_operand.vmem [shape: f32[2,4,256], index: 2, kind: output, shape index: {0}]
  %s3 = inlined_call_operand.vmem [shape: f32[2,1,1,128], index: 3, kind: output, shape index: {1}]
  %4 = xla_tuple %s2, %s3
  %s5 = sld [smem:[#allocation0]]
  $region49: #{softmax3d_forward.1} parent=0
    _
  %s7 = ssub.s32 1, %s5
  %s8 = scalar_select 0, %s7, %s5
  loop: start=0, step=1, limit=4
  $region2: #{softmax3d_forward.1} parent=0 // loop_pre_header
    _
  $region3: #{softmax3d_forward.1} parent=0 // loop_header
    %s10 = sphi 0, %s14
    %p11 = scmp.ge.s32.totalorder %s10, 4
    %s17 = sphi 0, %s29
    %s18 = sphi 0, %s25
    %s19 = sphi 0, %s17
    %s20 = sphi 0, %s18
    %s21 = sphi 0, %s19
    %s22 = sphi 0, %s20
    %s34 = sphi 0, %s36
    %s37 = sphi 0, %s34
    %s38 = sphi 0, %s37
    %s54 = sphi 0, %s38
    %s62 = sphi 0, %s64
    %s65 = sphi 0, %s62
    %s66 = sphi 0, %s65
    %s82 = sphi 0, %s66
    %s90 = sphi 0, %s92
    %s93 = sphi 0, %s90
    %s94 = sphi 0, %s93
    %s110 = sphi 0, %s94
    %s118 = sphi 0, %s120
    %s121 = sphi 0, %s118
    %s122 = sphi 0, %s121
    %s138 = sphi 0, %s122
  $region4: #{softmax3d_forward.1} parent=0 // loop_header_branch
    %13 = sbr.rel (%p11) target = $region8
  $region5: #{softmax3d_forward.1} parent=0 // loop_body
    %s15 = ssub.s32 %s10, 1
    %s16 = ssub.s32 %s10, 2
    %s23 = sadd.s32 1, %s18
    %p24 = scmp.ge.s32.totalorder %s23, 1
    %s25 = scalar_select %p24, 0, %s23
    %s26 = sadd.s32 1, %s17
    %s27 = scalar_select %p24, %s26, %s17
    %p28 = scmp.ge.s32.totalorder %s27, 2
    %s29 = scalar_select %p28, 0, %s27
    %s30 = ssub.s32 %s17, %s29
    %s31 = ssub.s32 %s18, %s25
    %s32 = sor.u32 %s30, %s31
    %p33 = scmp.eq.s32.totalorder %s32, 0
    %s35 = sadd.s32 %s34, 1
    %s36 = scalar_select %p33, %s34, %s35
    %p39 = pneg %p33
    %p40 = scmp.eq.s32.totalorder %s10, 1
    %p41 = por %p39, %p40
    %p42 = scmp.ne.s32.totalorder %s34, %s37
    %p43 = scmp.eq.s32.totalorder %s10, 0
    %p44 = por %p42, %p43
    %p45 = scmp.ne.s32.totalorder %s34, %s37
    %p46 = scmp.eq.s32.totalorder %s15, 1
    %p47 = por %p45, %p46
    %p48 = scmp.ne.s32.totalorder %s37, %s38
    %p49 = scmp.eq.s32.totalorder %s15, 0
    %p50 = por %p48, %p49
    %p51 = scmp.ne.s32.totalorder %s37, %s38
    %p52 = scmp.eq.s32.totalorder %s16, 1
    %p53 = por %p51, %p52
    %p55 = scmp.ne.s32.totalorder %s38, %s54
    %p56 = scmp.eq.s32.totalorder %s16, 0
    %p57 = por %p55, %p56
    %s58 = ssub.s32 %s17, %s29
    %s59 = ssub.s32 %s18, %s25
    %s60 = sor.u32 %s58, %s59
    %p61 = scmp.eq.s32.totalorder %s60, 0
    %s63 = sadd.s32 %s62, 1
    %s64 = scalar_select %p61, %s62, %s63
    %p67 = pneg %p61
    %p68 = scmp.eq.s32.totalorder %s10, 1
    %p69 = por %p67, %p68
    %p70 = scmp.ne.s32.totalorder %s62, %s65
    %p71 = scmp.eq.s32.totalorder %s10, 0
    %p72 = por %p70, %p71
    %p73 = scmp.ne.s32.totalorder %s62, %s65
    %p74 = scmp.eq.s32.totalorder %s15, 1
    %p75 = por %p73, %p74
    %p76 = scmp.ne.s32.totalorder %s65, %s66
    %p77 = scmp.eq.s32.totalorder %s15, 0
    %p78 = por %p76, %p77
    %p79 = scmp.ne.s32.totalorder %s65, %s66
    %p80 = scmp.eq.s32.totalorder %s16, 1
    %p81 = por %p79, %p80
    %p83 = scmp.ne.s32.totalorder %s66, %s82
    %p84 = scmp.eq.s32.totalorder %s16, 0
    %p85 = por %p83, %p84
    %s86 = ssub.s32 %s17, %s29
    %s87 = ssub.s32 %s18, %s25
    %s88 = sor.u32 %s86, %s87
    %p89 = scmp.eq.s32.totalorder %s88, 0
    %s91 = sadd.s32 %s90, 1
    %s92 = scalar_select %p89, %s90, %s91
    %p95 = pneg %p89
    %p96 = scmp.eq.s32.totalorder %s10, 1
    %p97 = por %p95, %p96
    %p98 = scmp.ne.s32.totalorder %s90, %s93
    %p99 = scmp.eq.s32.totalorder %s10, 0
    %p100 = por %p98, %p99
    %p101 = scmp.ne.s32.totalorder %s90, %s93
    %p102 = scmp.eq.s32.totalorder %s15, 1
    %p103 = por %p101, %p102
    %p104 = scmp.ne.s32.totalorder %s93, %s94
    %p105 = scmp.eq.s32.totalorder %s15, 0
    %p106 = por %p104, %p105
    %p107 = scmp.ne.s32.totalorder %s93, %s94
    %p108 = scmp.eq.s32.totalorder %s16, 1
    %p109 = por %p107, %p108
    %p111 = scmp.ne.s32.totalorder %s94, %s110
    %p112 = scmp.eq.s32.totalorder %s16, 0
    %p113 = por %p111, %p112
    %s114 = ssub.s32 %s17, %s29
    %s115 = ssub.s32 %s18, %s25
    %s116 = sor.u32 %s114, %s115
    %p117 = scmp.eq.s32.totalorder %s116, 0
    %s119 = sadd.s32 %s118, 1
    %s120 = scalar_select %p117, %s118, %s119
    %p123 = pneg %p117
    %p124 = scmp.eq.s32.totalorder %s10, 1
    %p125 = por %p123, %p124
    %p126 = scmp.ne.s32.totalorder %s118, %s121
    %p127 = scmp.eq.s32.totalorder %s10, 0
    %p128 = por %p126, %p127
    %p129 = scmp.ne.s32.totalorder %s118, %s121
    %p130 = scmp.eq.s32.totalorder %s15, 1
    %p131 = por %p129, %p130
    %p132 = scmp.ne.s32.totalorder %s121, %s122
    %p133 = scmp.eq.s32.totalorder %s15, 0
    %p134 = por %p132, %p133
    %p135 = scmp.ne.s32.totalorder %s121, %s122
    %p136 = scmp.eq.s32.totalorder %s16, 1
    %p137 = por %p135, %p136
    %p139 = scmp.ne.s32.totalorder %s122, %s138
    %p140 = scmp.eq.s32.totalorder %s16, 0
    %p141 = por %p139, %p140
    %p142 = scmp.le.s32.totalorder 1, %s10
    %p143 = scmp.lt.s32.totalorder %s10, 3
    %p144 = pnand %p142, %p143
    %p145 = pneg %p144
    // Predicated region
    $region9: #{softmax3d_forward.1} parent=5 // pred_check
      _
    $region10: #{softmax3d_forward.1} parent=5 // pred_check_branch
      %147 = sbr.rel (%p144) target = $region12
    $region11: #{softmax3d_forward.1} parent=5 // pred_region
      %s148 = ssub.s32 %s10, 1
    $region12: #{softmax3d_forward.1} parent=5 // pred_fallthru
      _
    %p149 = scmp.lt.s32.totalorder %s10, 2
    // Predicated region
    $region13: #{softmax3d_forward.1} parent=5 // pred_check
      %p150 = pneg %p149
    $region14: #{softmax3d_forward.1} parent=5 // pred_check_branch
      %152 = sbr.rel (%p150) target = $region16
    $region15: #{softmax3d_forward.1} parent=5 // pred_region
      // Predicated region
      $region17: #{softmax3d_forward.1} parent=15 // pred_check
        %p153 = pneg %p44
      $region18: #{softmax3d_forward.1} parent=15 // pred_check_branch
        %155 = sbr.rel (%p153) target = $region20
      $region19: #{softmax3d_forward.1} parent=15 // pred_region
        %s156 = smul.u32 2, %s18
        %p157 = scmp.lt.s32.totalorder %s17, 1
        %s158 = scalar_select %p157, %s17, 1
        %p159 = scmp.lt.s32.totalorder %s156, 1
        %s160 = scalar_select %p159, %s156, 1
        %s161 = smul.addr %s158, 2
        %s162 = sadd.s32 %s160, %s161
        %s163 = smul.addr %s162, 4
        %s164 = scalar_lea.vmem %s0, %s163
        %s165 = smul.u32 2, %s18
      $region20: #{softmax3d_forward.1} parent=15 // pred_fallthru
        _
      // Predicated region
      $region21: #{softmax3d_forward.1} parent=15 // pred_check
        %p166 = pneg %p72
      $region22: #{softmax3d_forward.1} parent=15 // pred_check_branch
        %168 = sbr.rel (%p166) target = $region24
      $region23: #{softmax3d_forward.1} parent=15 // pred_region
        %s169 = smul.u32 2, %s18
        %p170 = scmp.lt.s32.totalorder %s17, 1
        %s171 = scalar_select %p170, %s17, 1
        %p172 = scmp.lt.s32.totalorder %s169, 1
        %s173 = scalar_select %p172, %s169, 1
        %s174 = smul.addr %s171, 2
        %s175 = sadd.s32 %s173, %s174
        %s176 = smul.addr %s175, 4
        %s177 = scalar_lea.vmem %s1, %s176
        %s178 = smul.u32 2, %s18
      $region24: #{softmax3d_forward.1} parent=15 // pred_fallthru
        _
    $region16: #{softmax3d_forward.1} parent=5 // pred_fallthru
      _
    %p179 = scmp.le.s32.totalorder 1, %s10
    %p180 = scmp.lt.s32.totalorder %s10, 3
    %p181 = pnand %p179, %p180
    %p182 = pneg %p181
    // Predicated region
    $region25: #{softmax3d_forward.1} parent=5 // pred_check
      _
    $region26: #{softmax3d_forward.1} parent=5 // pred_check_branch
      %184 = sbr.rel (%p181) target = $region28
    $region27: #{softmax3d_forward.1} parent=5 // pred_region
      %s185 = ssub.s32 %s10, 1
      %s186 = smul.u32 2, %s20
      %p187 = scmp.lt.s32.totalorder %s19, 1
      %s188 = scalar_select %p187, %s19, 1
      %p189 = scmp.lt.s32.totalorder %s186, 1
      %s190 = scalar_select %p189, %s186, 1
      %s191 = smul.addr %s188, 2
      %s192 = sadd.s32 %s190, %s191
      %s193 = smul.addr %s192, 4
      %s194 = scalar_lea.vmem %s0, %s193
      %p195 = pneg %p50
      %p196 = pneg %p47
      %s197 = smul.u32 2, %s20
      %p198 = scmp.lt.s32.totalorder %s19, 1
      %s199 = scalar_select %p198, %s19, 1
      %p200 = scmp.lt.s32.totalorder %s197, 1
      %s201 = scalar_select %p200, %s197, 1
      %s202 = smul.addr %s199, 2
      %s203 = sadd.s32 %s201, %s202
      %s204 = smul.addr %s203, 4
      %s205 = scalar_lea.vmem %s1, %s204
      %p206 = pneg %p78
      %p207 = pneg %p75
      %p208 = pneg %p106
      %p209 = pneg %p103
      %s210 = smul.u32 2, %s20
      %p211 = scmp.lt.s32.totalorder %s19, 1
      %s212 = scalar_select %p211, %s19, 1
      %p213 = scmp.lt.s32.totalorder %s210, 1
      %s214 = scalar_select %p213, %s210, 1
      %s215 = smul.addr %s212, 2
      %s216 = sadd.s32 %s214, %s215
      %s217 = smul.addr %s216, 4
      %s218 = scalar_lea.vmem %s2, %s217
      %p219 = pneg %p134
      %p220 = pneg %p131
      %p221 = scmp.lt.s32.totalorder %s19, 1
      %s222 = scalar_select %p221, %s19, 1
      %p223 = scmp.lt.s32.totalorder %s20, 0
      %s224 = scalar_select %p223, %s20, 0
      %s225 = sadd.s32 %s224, %s222
      %s226 = scalar_lea.vmem %s3, %s225
      %s227 = smul.u32 2, %s20
      %p228 = scmp.lt.s32.totalorder %s19, 1
      %s229 = scalar_select %p228, %s19, 1
      %p230 = scmp.lt.s32.totalorder %s227, 1
      %s231 = scalar_select %p230, %s227, 1
      %s232 = smul.addr %s229, 2
      %s233 = sadd.s32 %s231, %s232
      %s234 = smul.addr %s233, 4
      %s235 = scalar_lea.vmem %s0, %s234
      %s236 = smul.u32 2, %s20
      %s237 = smul.u32 2, %s20
      %p238 = scmp.lt.s32.totalorder %s19, 1
      %s239 = scalar_select %p238, %s19, 1
      %p240 = scmp.lt.s32.totalorder %s237, 1
      %s241 = scalar_select %p240, %s237, 1
      %s242 = smul.addr %s239, 2
      %s243 = sadd.s32 %s241, %s242
      %s244 = smul.addr %s243, 4
      %s245 = scalar_lea.vmem %s1, %s244
      %s246 = smul.u32 2, %s20
      %s247 = smul.u32 2, %s20
      %p248 = scmp.lt.s32.totalorder %s19, 1
      %s249 = scalar_select %p248, %s19, 1
      %p250 = scmp.lt.s32.totalorder %s247, 1
      %s251 = scalar_select %p250, %s247, 1
      %s252 = smul.addr %s249, 2
      %s253 = sadd.s32 %s251, %s252
      %s254 = smul.addr %s253, 4
      %s255 = scalar_lea.vmem %s2, %s254
      %s256 = smul.u32 2, %s20
      %p257 = scmp.lt.s32.totalorder %s19, 1
      %s258 = scalar_select %p257, %s19, 1
      %p259 = scmp.lt.s32.totalorder %s20, 0
      %s260 = scalar_select %p259, %s20, 0
      %s261 = sadd.s32 %s260, %s258
      %s262 = scalar_lea.vmem %s3, %s261
      %v263 = vld [vmem:[%s235] sm:$0xff]
      %v264 = vld [vmem:[%s245] sm:$0xff]
      %266 = vst [vmem:[#allocation1] ss:$2 sm:$0xff] %v263
      %v267 = vld.sshfl [vmem:[#allocation1] sm:$0xff pattern:$0x75316420]
      %v268 = vld.sshfl [vmem:[#allocation1 + $0x8] sm:$0xff pattern:$0x75316420]
      %vm271 = vcmask 1043456
      %v272 = vsel %vm271, %v267, -inf
      %v273 = vrot.slane %v272, 4
      %v274 = vmax.f32 %v272, %v273
      %v275 = vrot.slane %v274, 2
      %v276 = vmax.f32 %v274, %v275
      %v277 = vrot.slane %v276, 1
      %v278 = vmax.f32 %v276, %v277
      %v279 = vsel %vm271, %v268, -inf
      %v280 = vrot.slane %v279, 4
      %v281 = vmax.f32 %v279, %v280
      %v282 = vrot.slane %v281, 2
      %v283 = vmax.f32 %v281, %v282
      %v284 = vrot.slane %v283, 1
      %v285 = vmax.f32 %v283, %v284
      %v288 = vrot.slane %v285, 4
      %v289 = vsel %vm271, %v278, %v288
      %v291 = vsub.f32 %v263, %v289
      %v292 = vmul.f32 %v291, 1.442695
      %v293 = vpow.pop %v292
      %295 = vst [vmem:[#allocation1] ss:$2 sm:$0xff] %v293
      %v296 = vld.sshfl [vmem:[#allocation1] sm:$0xff pattern:$0x75316420]
      %v297 = vld.sshfl [vmem:[#allocation1 + $0x8] sm:$0xff pattern:$0x75316420]
      %v300 = vsel %vm271, %v296, 0.0
      %v301 = vrot.slane %v300, 4
      %v302 = vadd.f32 %v300, %v301
      %v303 = vrot.slane %v302, 2
      %v304 = vadd.f32 %v302, %v303
      %v305 = vrot.slane %v304, 1
      %v306 = vadd.f32 %v304, %v305
      %v307 = vsel %vm271, %v297, 0.0
      %v308 = vrot.slane %v307, 4
      %v309 = vadd.f32 %v307, %v308
      %v310 = vrot.slane %v309, 2
      %v311 = vadd.f32 %v309, %v310
      %v312 = vrot.slane %v311, 1
      %v313 = vadd.f32 %v311, %v312
      %v314 = vrcp.pop %v306
      %v315 = vmul.f32 %v306, %v314
      %v316 = vsub.f32 1.0, %v315
      %v317 = vmul.f32 %v314, %v316
      %v318 = vadd.f32 %v314, %v317
      %vm319 = vweird.f32 %v306
      %vm320 = vweird.f32 %v314
      %vm321 = vmor %vm319, %vm320
      %v322 = vsel %vm321, %v314, %v318
      %v323 = vand.u32 2147483647, %v306
      %vm324 = vcmp.eq.f32.partialorder %v323, 8.507059e+37
      %v325 = vand.u32 %v306, 2147483648
      %v326 = vor.u32 1.1754944e-38, %v325
      %v327 = vsel %vm324, %v326, %v322
      %v328 = vrcp.pop %v313
      %v329 = vmul.f32 %v313, %v328
      %v330 = vsub.f32 1.0, %v329
      %v331 = vmul.f32 %v328, %v330
      %v332 = vadd.f32 %v328, %v331
      %vm333 = vweird.f32 %v313
      %vm334 = vweird.f32 %v328
      %vm335 = vmor %vm333, %vm334
      %v336 = vsel %vm335, %v328, %v332
      %v337 = vand.u32 2147483647, %v313
      %vm338 = vcmp.eq.f32.partialorder %v337, 8.507059e+37
      %v339 = vand.u32 %v313, 2147483648
      %v340 = vor.u32 1.1754944e-38, %v339
      %v341 = vsel %vm338, %v340, %v336
      %v344 = vrot.slane %v341, 4
      %v345 = vsel %vm271, %v327, %v344
      %v347 = vmul.f32 %v291, %v345
      %348 = vst [vmem:[%s255] sm:$0xff] %v347
      %v349 = vlog2.pop %v306
      %v350 = vmul.f32 %v349, 0.6931472
      %v351 = vlog2.pop %v313
      %v352 = vmul.f32 %v351, 0.6931472
      %v353 = vmul.f32 %v264, %v291
      %355 = vst [vmem:[#allocation1] ss:$2 sm:$0xff] %v353
      %v356 = vld.sshfl [vmem:[#allocation1] sm:$0xff pattern:$0x75316420]
      %v357 = vld.sshfl [vmem:[#allocation1 + $0x8] sm:$0xff pattern:$0x75316420]
      %v360 = vsel %vm271, %v356, 0.0
      %v361 = vrot.slane %v360, 4
      %v362 = vadd.f32 %v360, %v361
      %v363 = vrot.slane %v362, 2
      %v364 = vadd.f32 %v362, %v363
      %v365 = vrot.slane %v364, 1
      %v366 = vadd.f32 %v364, %v365
      %v367 = vsel %vm271, %v357, 0.0
      %v368 = vrot.slane %v367, 4
      %v369 = vadd.f32 %v367, %v368
      %v370 = vrot.slane %v369, 2
      %v371 = vadd.f32 %v369, %v370
      %v372 = vrot.slane %v371, 1
      %v373 = vadd.f32 %v371, %v372
      %v374 = vsub.f32 %v350, %v366
      %v375 = vsub.f32 %v352, %v373
      %vm376 = vcmask 1040384
      %v377 = vsel %vm376, %v374, 0.0
      %v378 = vsel %vm376, %v375, 0.0
      %v379 = vadd.f32 %v377, %v378
      %380 = vadd.xlane.f32.xlu0 %v379
      %v381 = vpop.xlane.xlu0 %380
      %v382 = vrot.slane %v381, 4
      %v383 = vadd.f32 %v381, %v382
      %v384 = vrot.slane %v383, 2
      %v385 = vadd.f32 %v383, %v384
      %v386 = vrot.slane %v385, 1
      %v387 = vadd.f32 %v385, %v386
      %s388 = vtos %v387
      %v389 = vlaneseq
      %v390 = vand.u32 %v389, 127
      %vm391 = vcmp.eq.s32.totalorder %v390, 0
      %v392 = vstv %s388
      %v393 = vsel %vm391, %v392, 0.0
      %394 = vst [vmem:[%s262] sm:$0x1] %v393
      %s395 = smul.u32 2, %s20
      %p396 = scmp.lt.s32.totalorder %s19, 1
      %s397 = scalar_select %p396, %s19, 1
      %p398 = scmp.lt.s32.totalorder %s395, 1
      %s399 = scalar_select %p398, %s395, 1
      %s400 = smul.addr %s397, 2
      %s401 = sadd.s32 %s399, %s400
      %s402 = smul.addr %s401, 4
      %s403 = scalar_lea.vmem %s2, %s402
      %p404 = scmp.lt.s32.totalorder %s19, 1
      %s405 = scalar_select %p404, %s19, 1
      %p406 = scmp.lt.s32.totalorder %s20, 0
      %s407 = scalar_select %p406, %s20, 0
      %s408 = sadd.s32 %s407, %s405
      %s409 = scalar_lea.vmem %s3, %s408
      // Predicated region
      $region29: #{softmax3d_forward.1} parent=27 // pred_check
        %p410 = pneg %p103
      $region30: #{softmax3d_forward.1} parent=27 // pred_check_branch
        %412 = sbr.rel (%p410) target = $region32
      $region31: #{softmax3d_forward.1} parent=27 // pred_region
        %s413 = smul.u32 2, %s20
      $region32: #{softmax3d_forward.1} parent=27 // pred_fallthru
        _
      // Predicated region
      $region33: #{softmax3d_forward.1} parent=27 // pred_check
        %p414 = pneg %p131
      $region34: #{softmax3d_forward.1} parent=27 // pred_check_branch
        %416 = sbr.rel (%p414) target = $region36
      $region35: #{softmax3d_forward.1} parent=27 // pred_region
        _
      $region36: #{softmax3d_forward.1} parent=27 // pred_fallthru
        _
    $region28: #{softmax3d_forward.1} parent=5 // pred_fallthru
      _
    %p417 = scmp.le.s32.totalorder 2, %s10
    // Predicated region
    $region37: #{softmax3d_forward.1} parent=5 // pred_check
      %p418 = pneg %p417
    $region38: #{softmax3d_forward.1} parent=5 // pred_check_branch
      %420 = sbr.rel (%p418) target = $region40
    $region39: #{softmax3d_forward.1} parent=5 // pred_region
      %s421 = ssub.s32 %s10, 2
      // Predicated region
      $region41: #{softmax3d_forward.1} parent=39 // pred_check
        %p422 = pneg %p109
      $region42: #{softmax3d_forward.1} parent=39 // pred_check_branch
        %424 = sbr.rel (%p422) target = $region44
      $region43: #{softmax3d_forward.1} parent=39 // pred_region
        %s425 = smul.u32 2, %s22
        %p426 = scmp.lt.s32.totalorder %s21, 1
        %s427 = scalar_select %p426, %s21, 1
        %p428 = scmp.lt.s32.totalorder %s425, 1
        %s429 = scalar_select %p428, %s425, 1
        %s430 = smul.addr %s427, 2
        %s431 = sadd.s32 %s429, %s430
        %s432 = smul.addr %s431, 4
        %s433 = scalar_lea.vmem %s2, %s432
      $region44: #{softmax3d_forward.1} parent=39 // pred_fallthru
        _
      // Predicated region
      $region45: #{softmax3d_forward.1} parent=39 // pred_check
        %p434 = pneg %p137
      $region46: #{softmax3d_forward.1} parent=39 // pred_check_branch
        %436 = sbr.rel (%p434) target = $region48
      $region47: #{softmax3d_forward.1} parent=39 // pred_region
        %p437 = scmp.lt.s32.totalorder %s21, 1
        %s438 = scalar_select %p437, %s21, 1
        %p439 = scmp.lt.s32.totalorder %s22, 0
        %s440 = scalar_select %p439, %s22, 0
        %s441 = sadd.s32 %s440, %s438
        %s442 = scalar_lea.vmem %s3, %s441
      $region48: #{softmax3d_forward.1} parent=39 // pred_fallthru
        _
    $region40: #{softmax3d_forward.1} parent=5 // pred_fallthru
      _
  $region6: #{softmax3d_forward.1} parent=0 // loop_footer
    %s14 = sadd.s32 1, %s10
  $region7: #{softmax3d_forward.1} parent=0 // loop_footer_branch
    %9 = sbr.rel target = $region3
  $region8: #{softmax3d_forward.1} parent=0 // loop_exit
    _

</llo_original>
